<compile_context>
chip_gen: v7x
topology: tpu7x:2x2x1
jax: 0.10.0
libtpu: 0.0.40
codegen_flags: <defaults>
</compile_context>

<pallas_src>
import functools

import numpy as np
import jax
import jax.numpy as jnp
from jax import lax
from jax.experimental import pallas as pl
from jax.experimental.pallas import tpu as pltpu


KH = 10                      # H kernel size of every layer
C1 = 10                      # conv1 / upscore1 channel count
H_OUT = (KH - 1) * 3 + KH    # = 37, output height of upscore2
P = KH * C1                  # = 100, rows of the conv1 activation


# ----------------------------------------------------------------------------
# Fused kernel: conv1(+bias,ReLU) as two matmuls, folded tail as one matmul.
# One grid step == one batch element; everything stays in VMEM/vregs.
# ----------------------------------------------------------------------------
def _bfnet_kernel(x_ref, wpk_ref, bias_ref, out_ref, *, h, w):
    wo = w - 1                                   # final width after up2 crop

    x = x_ref[0].astype(jnp.bfloat16)            # (h, w)
    tap0 = x[:, 0:wo]                            # conv1 kw-tap 0   (h, wo)
    tap1 = x[:, 1:w]                             # conv1 kw-tap 1   (h, wo)

    w1b0 = wpk_ref[0][:, :h]                     # (P, h)    bf16
    w1b1 = wpk_ref[1][:, :h]                     # (P, h)    bf16
    wtail = wpk_ref[2][:H_OUT, :]                # (37, P)   bf16
    b1 = bias_ref[0]                             # (P, 1)    f32
    btail = bias_ref[1][:H_OUT]                  # (37, 1)   f32

    # conv1 (kernel (10,2), stride (3,1)) + bias + ReLU, f32 accumulation.
    acc = (jnp.dot(w1b0, tap0, preferred_element_type=jnp.float32)
           + jnp.dot(w1b1, tap1, preferred_element_type=jnp.float32)
           + b1)
    act1 = jnp.maximum(acc, 0.0).astype(jnp.bfloat16)        # (P, wo)

    # fc1 + upscore1 + upscore2, folded into a single affine map on the rows.
    out_ref[0] = jnp.dot(wtail, act1, preferred_element_type=jnp.float32) + btail


# ----------------------------------------------------------------------------
# One-time host-side weight folding (PyTorch layouts -> packed matmul operands)
# ----------------------------------------------------------------------------
def prepare_bfnet_params(params, h):
    ho = (h - KH) // 3 + 1
    assert (h - KH) % 3 == 0 and ho == KH, \
        "fc1 (kernel 10, no pad) requires conv1 output height 10"
    classes = params["fc1_w"].shape[0]

    w1 = np.asarray(params["conv1_w"], np.float32)   # (C1, 1, KH, 2)
    b1 = np.asarray(params["conv1_b"], np.float32)
    wfc = np.asarray(params["fc1_w"], np.float32)    # (classes, C1, KH, 1)
    bfc = np.asarray(params["fc1_b"], np.float32)
    wu1 = np.asarray(params["up1_w"], np.float32)    # (classes, C1, KH, 1)  (in,out,kh,kw)
    bu1 = np.asarray(params["up1_b"], np.float32)
    wu2 = np.asarray(params["up2_w"], np.float32)    # (C1, 1, KH, 1)        (in,out,kh,kw)
    bu2 = np.asarray(params["up2_b"], np.float32)

    # conv1 H-correlation (kernel 10, stride 3) as two dense (ho*C1, h)
    # matrices, one per kw tap:  W1big[t][i*C1 + c, 3*i + a] = w1[c, 0, a, t]
    w1big = np.zeros((2, P, h), np.float32)
    for t in range(2):
        for i in range(ho):
            for c in range(C1):
                w1big[t, i * C1 + c, 3 * i: 3 * i + KH] = w1[c, 0, :, t]
    b1t = np.tile(b1, ho)                            # (P,) row i*C1+c -> b1[c]

    # fc1 / upscore1 / upscore2 as dense matrices on the (h, c) row layout.
    wfc_m = np.transpose(wfc[:, :, :, 0], (0, 2, 1)).reshape(classes, P)
    wu1_m = np.transpose(wu1[:, :, :, 0], (2, 1, 0)).reshape(P, classes)
    bu1t = np.tile(bu1, KH)                          # (P,)
    wu2big = np.zeros((H_OUT, P), np.float32)        # transposed-conv H scatter
    for hi in range(KH):
        for a in range(KH):
            wu2big[3 * hi + a, hi * C1: (hi + 1) * C1] = wu2[:, 0, a, 0]

    # Exact algebraic fold of the three affine layers after the ReLU.
    wtail = wu2big @ wu1_m @ wfc_m                   # (37, P)
    btail = wu2big @ (wu1_m @ bfc + bu1t) + bu2[0]   # (37,)

    # Pack into one bf16 weight buffer (3 planes) + one f32 bias buffer.
    wpk = np.zeros((3, P, P), np.float32)
    wpk[0, :, :h] = w1big[0]
    wpk[1, :, :h] = w1big[1]
    wpk[2, :H_OUT, :] = wtail
    bias = np.zeros((2, P, 1), np.float32)
    bias[0, :, 0] = b1t
    bias[1, :H_OUT, 0] = btail
    return {"wpk": jnp.asarray(wpk, jnp.bfloat16),
            "bias": jnp.asarray(bias, jnp.float32)}


# ----------------------------------------------------------------------------
# Forward wrapper (jit-able): only free reshapes outside the kernel.
# ----------------------------------------------------------------------------
def bfnet_forward(x, prep):
    """x: (N, 1, H, W) NCHW float32 -> (N, 1, 37, W-1), PyTorch BFNet semantics."""
    n, _, h, w = x.shape
    x3 = x.reshape(n, h, w)                          # drop channel dim (free)

    out = pl.pallas_call(
        functools.partial(_bfnet_kernel, h=h, w=w),
        grid=(n,),
        in_specs=[
            pl.BlockSpec((1, h, w), lambda b: (b, 0, 0)),     # per-batch input
            pl.BlockSpec((3, P, P), lambda b: (0, 0, 0)),     # weights (resident)
            pl.BlockSpec((2, P, 1), lambda b: (0, 0, 0)),     # biases  (resident)
        ],
        out_specs=pl.BlockSpec((1, H_OUT, w - 1), lambda b: (b, 0, 0)),
        out_shape=jax.ShapeDtypeStruct((n, H_OUT, w - 1), jnp.float32),
        compiler_params=pltpu.CompilerParams(
            dimension_semantics=("parallel",),       # 2-TC sharding on v7x
            vmem_limit_bytes=4 * 1024 * 1024),
    )(x3, prep["wpk"], prep["bias"])

    return out.reshape(n, 1, H_OUT, w - 1)           # add channel dim (free)


# ----------------------------------------------------------------------------
# Independent pure-JAX reference (lax convolutions, PyTorch conventions)
# ----------------------------------------------------------------------------
def ref_forward(x, params):
    dn = ("NCHW", "OIHW", "NCHW")
    hp = lax.Precision.HIGHEST

    def cv(y, w, stride, padding, lhs_dilation=(1, 1)):
        return lax.conv_general_dilated(y, w, stride, padding,
                                        lhs_dilation=lhs_dilation,
                                        dimension_numbers=dn, precision=hp)

    def tconv_w(w):   # ConvTranspose2d weight (in,out,kh,kw) -> flipped OIHW
        return jnp.transpose(jnp.flip(w, (2, 3)), (1, 0, 2, 3))

    y = cv(x, params["conv1_w"], (3, 1), [(0, 0), (1, 1)])
    y = jnp.maximum(y + params["conv1_b"].reshape(1, -1, 1, 1), 0.0)
    y = cv(y, params["fc1_w"], (1, 1), [(0, 0), (0, 0)])
    y = y + params["fc1_b"].reshape(1, -1, 1, 1)
    y = cv(y, tconv_w(params["up1_w"]), (1, 1), [(9, 9), (0, 0)])
    y = y + params["up1_b"].reshape(1, -1, 1, 1)
    y = cv(y, tconv_w(params["up2_w"]), (1, 1), [(9, 9), (-1, -1)],
           lhs_dilation=(3, 1))
    y = y + params["up2_b"].reshape(1, -1, 1, 1)
    return y


# ----------------------------------------------------------------------------
# Main
# ----------------------------------------------------------------------------
if __name__ == "__main__":
    key = jax.random.PRNGKey(0)
    ks = jax.random.split(key, 9)
    classes = 2

    # Deterministic synthetic parameters (PyTorch weight layouts).
    params = {
        "conv1_w": 0.1 * jax.random.normal(ks[0], (10, 1, 10, 2), jnp.float32),
        "conv1_b": 0.1 * jax.random.normal(ks[1], (10,), jnp.float32),
        "fc1_w":   0.1 * jax.random.normal(ks[2], (classes, 10, 10, 1), jnp.float32),
        "fc1_b":   0.1 * jax.random.normal(ks[3], (classes,), jnp.float32),
        "up1_w":   0.1 * jax.random.normal(ks[4], (classes, 10, 10, 1), jnp.float32),
        "up1_b":   0.1 * jax.random.normal(ks[5], (10,), jnp.float32),
        "up2_w":   0.1 * jax.random.normal(ks[6], (10, 1, 10, 1), jnp.float32),
        "up2_b":   0.1 * jax.random.normal(ks[7], (1,), jnp.float32),
    }

    # (2,1,37,16) -> conv1 (2,10,10,17) -> fc1 (2,2,1,17)
    #             -> up1  (2,10,10,17)  -> up2 (2,1,37,15)
    x = jax.random.normal(ks[8], (2, 1, 37, 16), jnp.float32)

    prep = prepare_bfnet_params(params, h=x.shape[2])          # once, host side
    fwd = jax.jit(bfnet_forward)
    out = jax.block_until_ready(fwd(x, prep))
    assert out.shape == (2, 1, 37, 15), out.shape

    ref = ref_forward(x, params)
    np.testing.assert_allclose(np.asarray(out), np.asarray(ref),
                               rtol=2e-2, atol=3e-3)

    print("KERNEL_OK")
</pallas_src>

<mosaic_0001>
module attributes {stable_mosaic.version = 11 : i64} {
  func.func @_bfnet_kernel(%arg0: i32, %arg1: memref<1x37x16xf32, #tpu.memory_space<vmem>>, %arg2: memref<3x100x100xbf16, #tpu.memory_space<vmem>>, %arg3: memref<2x100x1xf32, #tpu.memory_space<vmem>>, %arg4: memref<1x37x15xf32, #tpu.memory_space<vmem>>) attributes {dimension_semantics = [#tpu.dimension_semantics<parallel>], iteration_bounds = array<i64: 2>, scalar_prefetch = 0 : i64, scratch_operands = 0 : i64, tpu.core_type = #tpu.core_type<tc>, window_params = [{transform_indices = @transform_0, window_bounds = array<i64: 1, 37, 16>}, {pipeline_mode = #tpu.pipeline_mode<synchronous>, transform_indices = @transform_1, window_bounds = array<i64: 3, 100, 100>}, {pipeline_mode = #tpu.pipeline_mode<synchronous>, transform_indices = @transform_2, window_bounds = array<i64: 2, 100, 1>}, {transform_indices = @transform_3, window_bounds = array<i64: 1, 37, 15>}]} {
    %c0 = arith.constant 0 : index
    %c0_0 = arith.constant 0 : index
    %c0_1 = arith.constant 0 : index
    %0 = vector.load %arg1[%c0, %c0_0, %c0_1] : memref<1x37x16xf32, #tpu.memory_space<vmem>>, vector<1x37x16xf32>
    %1 = vector.shape_cast %0 : vector<1x37x16xf32> to vector<37x16xf32>
    %2 = arith.truncf %1 : vector<37x16xf32> to vector<37x16xbf16>
    %3 = vector.extract_strided_slice %2 {offsets = [0, 0], sizes = [37, 15], strides = [1, 1]} : vector<37x16xbf16> to vector<37x15xbf16>
    %4 = vector.extract_strided_slice %2 {offsets = [0, 1], sizes = [37, 15], strides = [1, 1]} : vector<37x16xbf16> to vector<37x15xbf16>
    %c0_2 = arith.constant 0 : index
    %c0_3 = arith.constant 0 : index
    %c0_4 = arith.constant 0 : index
    %5 = vector.load %arg2[%c0_2, %c0_3, %c0_4] : memref<3x100x100xbf16, #tpu.memory_space<vmem>>, vector<1x100x100xbf16>
    %6 = vector.shape_cast %5 : vector<1x100x100xbf16> to vector<100x100xbf16>
    %7 = vector.extract_strided_slice %6 {offsets = [0, 0], sizes = [100, 37], strides = [1, 1]} : vector<100x100xbf16> to vector<100x37xbf16>
    %c1 = arith.constant 1 : index
    %c0_5 = arith.constant 0 : index
    %c0_6 = arith.constant 0 : index
    %8 = vector.load %arg2[%c1, %c0_5, %c0_6] : memref<3x100x100xbf16, #tpu.memory_space<vmem>>, vector<1x100x100xbf16>
    %9 = vector.shape_cast %8 : vector<1x100x100xbf16> to vector<100x100xbf16>
    %10 = vector.extract_strided_slice %9 {offsets = [0, 0], sizes = [100, 37], strides = [1, 1]} : vector<100x100xbf16> to vector<100x37xbf16>
    %c2 = arith.constant 2 : index
    %c0_7 = arith.constant 0 : index
    %c0_8 = arith.constant 0 : index
    %11 = vector.load %arg2[%c2, %c0_7, %c0_8] : memref<3x100x100xbf16, #tpu.memory_space<vmem>>, vector<1x100x100xbf16>
    %12 = vector.shape_cast %11 : vector<1x100x100xbf16> to vector<100x100xbf16>
    %13 = vector.extract_strided_slice %12 {offsets = [0, 0], sizes = [37, 100], strides = [1, 1]} : vector<100x100xbf16> to vector<37x100xbf16>
    %c0_9 = arith.constant 0 : index
    %c0_10 = arith.constant 0 : index
    %c0_11 = arith.constant 0 : index
    %14 = vector.load %arg3[%c0_9, %c0_10, %c0_11] : memref<2x100x1xf32, #tpu.memory_space<vmem>>, vector<1x100x1xf32>
    %15 = vector.shape_cast %14 : vector<1x100x1xf32> to vector<100x1xf32>
    %c1_12 = arith.constant 1 : index
    %c0_13 = arith.constant 0 : index
    %c0_14 = arith.constant 0 : index
    %16 = vector.load %arg3[%c1_12, %c0_13, %c0_14] : memref<2x100x1xf32, #tpu.memory_space<vmem>>, vector<1x100x1xf32>
    %17 = vector.shape_cast %16 : vector<1x100x1xf32> to vector<100x1xf32>
    %18 = vector.extract_strided_slice %17 {offsets = [0, 0], sizes = [37, 1], strides = [1, 1]} : vector<100x1xf32> to vector<37x1xf32>
    %cst = arith.constant dense<0.000000e+00> : vector<100x15xf32>
    %19 = tpu.matmul %7, %3, %cst {dimension_numbers = #tpu.dot_dimension_numbers<[1], [0], [0], [1], [0, 0, 1, 1], [], []>} : vector<100x37xbf16>, vector<37x15xbf16>, vector<100x15xf32> -> vector<100x15xf32>
    %cst_15 = arith.constant dense<0.000000e+00> : vector<100x15xf32>
    %20 = tpu.matmul %10, %4, %cst_15 {dimension_numbers = #tpu.dot_dimension_numbers<[1], [0], [0], [1], [0, 0, 1, 1], [], []>} : vector<100x37xbf16>, vector<37x15xbf16>, vector<100x15xf32> -> vector<100x15xf32>
    %21 = arith.addf %19, %20 : vector<100x15xf32>
    %22 = vector.broadcast %15 : vector<100x1xf32> to vector<100x15xf32>
    %23 = arith.addf %21, %22 : vector<100x15xf32>
    %cst_16 = arith.constant 0.000000e+00 : f32
    %24 = vector.broadcast %cst_16 : f32 to vector<100x15xf32>
    %25 = arith.maximumf %23, %24 : vector<100x15xf32>
    %26 = arith.truncf %25 : vector<100x15xf32> to vector<100x15xbf16>
    %cst_17 = arith.constant dense<0.000000e+00> : vector<37x15xf32>
    %27 = tpu.matmul %13, %26, %cst_17 {dimension_numbers = #tpu.dot_dimension_numbers<[1], [0], [0], [1], [0, 0, 1, 1], [], []>} : vector<37x100xbf16>, vector<100x15xbf16>, vector<37x15xf32> -> vector<37x15xf32>
    %28 = vector.broadcast %18 : vector<37x1xf32> to vector<37x15xf32>
    %29 = arith.addf %27, %28 : vector<37x15xf32>
    %c0_18 = arith.constant 0 : index
    %c0_19 = arith.constant 0 : index
    %c0_20 = arith.constant 0 : index
    %30 = vector.load %arg4[%c0_18, %c0_19, %c0_20] : memref<1x37x15xf32, #tpu.memory_space<vmem>>, vector<1x37x15xf32>
    %31 = vector.shape_cast %30 : vector<1x37x15xf32> to vector<37x15xf32>
    %32 = vector.shape_cast %29 : vector<37x15xf32> to vector<1x37x15xf32>
    tpu.vector_store %arg4[%c0_18, %c0_19, %c0_20], %32 {strides = array<i32>} : memref<1x37x15xf32, #tpu.memory_space<vmem>>, vector<1x37x15xf32>,
    return
  }
  func.func @transform_0(%arg0: i32) -> (i32, i32, i32) {
    %c0_i32 = arith.constant 0 : i32
    %c0_i32_0 = arith.constant 0 : i32
    %c0_i32_1 = arith.constant 0 : i32
    return %arg0, %c0_i32, %c0_i32_0 : i32, i32, i32
  }
  func.func @transform_1(%arg0: i32) -> (i32, i32, i32) {
    %c0_i32 = arith.constant 0 : i32
    %c0_i32_0 = arith.constant 0 : i32
    %c0_i32_1 = arith.constant 0 : i32
    %c0_i32_2 = arith.constant 0 : i32
    return %c0_i32, %c0_i32_0, %c0_i32_1 : i32, i32, i32
  }
  func.func @transform_2(%arg0: i32) -> (i32, i32, i32) {
    %c0_i32 = arith.constant 0 : i32
    %c0_i32_0 = arith.constant 0 : i32
    %c0_i32_1 = arith.constant 0 : i32
    %c0_i32_2 = arith.constant 0 : i32
    return %c0_i32, %c0_i32_0, %c0_i32_1 : i32, i32, i32
  }
  func.func @transform_3(%arg0: i32) -> (i32, i32, i32) {
    %c0_i32 = arith.constant 0 : i32
    %c0_i32_0 = arith.constant 0 : i32
    %c0_i32_1 = arith.constant 0 : i32
    return %arg0, %c0_i32, %c0_i32_0 : i32, i32, i32
  }
}

</mosaic_0001>

<llo_original>
// kernel: bfnet_forward.1
$region0: #{bfnet_forward.1}
  #allocation0 [shape = 'u32[]', space=smem, size = 0x4, offset = 0x4, fixed_abs, tag = 'smem constant byte address 0x4 - core index']
  #allocation1 [shape = 'u32[144,128]{1,0:T(1,128)}', space=vmem, size = 0x12000, scoped, tag = 'internal scratch']
  %s0 = inlined_call_operand.vmem [shape: f32[2,37,16], index: 0, kind: input, shape index: {}]
  %s1 = inlined_call_operand.vmem [shape: bf16[3,100,100], index: 1, kind: input, shape index: {}]
  %s2 = inlined_call_operand.vmem [shape: f32[2,100,1], index: 2, kind: input, shape index: {}]
  %s3 = inlined_call_operand.vmem [shape: f32[2,37,15], index: 3, kind: output, shape index: {}]
  %s4 = sld [smem:[#allocation0]]
  $region45: #{bfnet_forward.1} parent=0
    _
  %s6 = ssub.s32 1, %s4
  %s7 = scalar_select 0, %s6, %s4
  loop: start=0, step=1, limit=4
  $region2: #{bfnet_forward.1} parent=0 // loop_pre_header
    _
  $region3: #{bfnet_forward.1} parent=0 // loop_header
    %s9 = sphi 0, %s13
    %p10 = scmp.ge.s32.totalorder %s9, 4
    %s19 = sphi 0, %s21
    %s22 = sphi 0, %s19
    %s23 = sphi 0, %s22
    %s39 = sphi 0, %s23
    %s43 = sphi 0, %s43
    %s45 = sphi 0, %s43
    %s46 = sphi 0, %s45
    %s60 = sphi 0, %s46
    %s64 = sphi 0, %s64
    %s66 = sphi 0, %s64
    %s67 = sphi 0, %s66
    %s81 = sphi 0, %s67
    %s87 = sphi 0, %s89
    %s90 = sphi 0, %s87
    %s91 = sphi 0, %s90
    %s107 = sphi 0, %s91
  $region4: #{bfnet_forward.1} parent=0 // loop_header_branch
    %12 = sbr.rel (%p10) target = $region8
  $region5: #{bfnet_forward.1} parent=0 // loop_body
    %s14 = ssub.s32 %s9, 1
    %s15 = ssub.s32 %s9, 2
    %s16 = sadd.s32 %s9, 1
    %s17 = ssub.s32 %s9, %s16
    %p18 = scmp.eq.s32.totalorder %s17, 0
    %s20 = sadd.s32 %s19, 1
    %s21 = scalar_select %p18, %s19, %s20
    %p24 = pneg %p18
    %p25 = scmp.eq.s32.totalorder %s9, 1
    %p26 = por %p24, %p25
    %p27 = scmp.ne.s32.totalorder %s19, %s22
    %p28 = scmp.eq.s32.totalorder %s9, 0
    %p29 = por %p27, %p28
    %p30 = scmp.ne.s32.totalorder %s19, %s22
    %p31 = scmp.eq.s32.totalorder %s14, 1
    %p32 = por %p30, %p31
    %p33 = scmp.ne.s32.totalorder %s22, %s23
    %p34 = scmp.eq.s32.totalorder %s14, 0
    %p35 = por %p33, %p34
    %p36 = scmp.ne.s32.totalorder %s22, %s23
    %p37 = scmp.eq.s32.totalorder %s15, 1
    %p38 = por %p36, %p37
    %p40 = scmp.ne.s32.totalorder %s23, %s39
    %p41 = scmp.eq.s32.totalorder %s15, 0
    %p42 = por %p40, %p41
    %s44 = sadd.s32 %s43, 1
    %p47 = scmp.eq.s32.totalorder %s9, 1
    %p48 = scmp.ne.s32.totalorder %s43, %s45
    %p49 = scmp.eq.s32.totalorder %s9, 0
    %p50 = por %p48, %p49
    %p51 = scmp.ne.s32.totalorder %s43, %s45
    %p52 = scmp.eq.s32.totalorder %s14, 1
    %p53 = por %p51, %p52
    %p54 = scmp.ne.s32.totalorder %s45, %s46
    %p55 = scmp.eq.s32.totalorder %s14, 0
    %p56 = por %p54, %p55
    %p57 = scmp.ne.s32.totalorder %s45, %s46
    %p58 = scmp.eq.s32.totalorder %s15, 1
    %p59 = por %p57, %p58
    %p61 = scmp.ne.s32.totalorder %s46, %s60
    %p62 = scmp.eq.s32.totalorder %s15, 0
    %p63 = por %p61, %p62
    %s65 = sadd.s32 %s64, 1
    %p68 = scmp.eq.s32.totalorder %s9, 1
    %p69 = scmp.ne.s32.totalorder %s64, %s66
    %p70 = scmp.eq.s32.totalorder %s9, 0
    %p71 = por %p69, %p70
    %p72 = scmp.ne.s32.totalorder %s64, %s66
    %p73 = scmp.eq.s32.totalorder %s14, 1
    %p74 = por %p72, %p73
    %p75 = scmp.ne.s32.totalorder %s66, %s67
    %p76 = scmp.eq.s32.totalorder %s14, 0
    %p77 = por %p75, %p76
    %p78 = scmp.ne.s32.totalorder %s66, %s67
    %p79 = scmp.eq.s32.totalorder %s15, 1
    %p80 = por %p78, %p79
    %p82 = scmp.ne.s32.totalorder %s67, %s81
    %p83 = scmp.eq.s32.totalorder %s15, 0
    %p84 = por %p82, %p83
    %s85 = ssub.s32 %s9, %s16
    %p86 = scmp.eq.s32.totalorder %s85, 0
    %s88 = sadd.s32 %s87, 1
    %s89 = scalar_select %p86, %s87, %s88
    %p92 = pneg %p86
    %p93 = scmp.eq.s32.totalorder %s9, 1
    %p94 = por %p92, %p93
    %p95 = scmp.ne.s32.totalorder %s87, %s90
    %p96 = scmp.eq.s32.totalorder %s9, 0
    %p97 = por %p95, %p96
    %p98 = scmp.ne.s32.totalorder %s87, %s90
    %p99 = scmp.eq.s32.totalorder %s14, 1
    %p100 = por %p98, %p99
    %p101 = scmp.ne.s32.totalorder %s90, %s91
    %p102 = scmp.eq.s32.totalorder %s14, 0
    %p103 = por %p101, %p102
    %p104 = scmp.ne.s32.totalorder %s90, %s91
    %p105 = scmp.eq.s32.totalorder %s15, 1
    %p106 = por %p104, %p105
    %p108 = scmp.ne.s32.totalorder %s91, %s107
    %p109 = scmp.eq.s32.totalorder %s15, 0
    %p110 = por %p108, %p109
    %p111 = scmp.le.s32.totalorder 1, %s9
    %p112 = scmp.lt.s32.totalorder %s9, 3
    %p113 = pnand %p111, %p112
    %p114 = pneg %p113
    // Predicated region
    $region9: #{bfnet_forward.1} parent=5 // pred_check
      _
    $region10: #{bfnet_forward.1} parent=5 // pred_check_branch
      %116 = sbr.rel (%p113) target = $region12
    $region11: #{bfnet_forward.1} parent=5 // pred_region
      %s117 = ssub.s32 %s9, 1
      // Predicated region
      $region13: #{bfnet_forward.1} parent=11 // pred_check
        %p118 = pneg %p56
      $region14: #{bfnet_forward.1} parent=11 // pred_check_branch
        %120 = sbr.rel (%p118) target = $region16
      $region15: #{bfnet_forward.1} parent=11 // pred_region
        _
      $region16: #{bfnet_forward.1} parent=11 // pred_fallthru
        _
      // Predicated region
      $region17: #{bfnet_forward.1} parent=11 // pred_check
        %p121 = pneg %p77
      $region18: #{bfnet_forward.1} parent=11 // pred_check_branch
        %123 = sbr.rel (%p121) target = $region20
      $region19: #{bfnet_forward.1} parent=11 // pred_region
        _
      $region20: #{bfnet_forward.1} parent=11 // pred_fallthru
        _
    $region12: #{bfnet_forward.1} parent=5 // pred_fallthru
      _
    %p124 = scmp.lt.s32.totalorder %s9, 2
    // Predicated region
    $region21: #{bfnet_forward.1} parent=5 // pred_check
      %p125 = pneg %p124
    $region22: #{bfnet_forward.1} parent=5 // pred_check_branch
      %127 = sbr.rel (%p125) target = $region24
    $region23: #{bfnet_forward.1} parent=5 // pred_region
      // Predicated region
      $region25: #{bfnet_forward.1} parent=23 // pred_check
        %p128 = pneg %p29
      $region26: #{bfnet_forward.1} parent=23 // pred_check_branch
        %130 = sbr.rel (%p128) target = $region28
      $region27: #{bfnet_forward.1} parent=23 // pred_region
        %p131 = scmp.lt.s32.totalorder %s9, 1
        %s132 = scalar_select %p131, %s9, 1
        %s133 = smul.addr %s132, 5
        %s134 = smul.addr %s133, 8
        %s135 = scalar_lea.vmem %s0, %s134
      $region28: #{bfnet_forward.1} parent=23 // pred_fallthru
        _
    $region24: #{bfnet_forward.1} parent=5 // pred_fallthru
      _
    %p136 = scmp.le.s32.totalorder 1, %s9
    %p137 = scmp.lt.s32.totalorder %s9, 3
    %p138 = pnand %p136, %p137
    %p139 = pneg %p138
    // Predicated region
    $region29: #{bfnet_forward.1} parent=5 // pred_check
      _
    $region30: #{bfnet_forward.1} parent=5 // pred_check_branch
      %141 = sbr.rel (%p138) target = $region32
    $region31: #{bfnet_forward.1} parent=5 // pred_region
      %s142 = ssub.s32 %s9, 1
      %p143 = scmp.lt.s32.totalorder %s14, 1
      %s144 = scalar_select %p143, %s14, 1
      %s145 = smul.addr %s144, 5
      %s146 = smul.addr %s145, 8
      %s147 = scalar_lea.vmem %s0, %s146
      %p148 = pneg %p35
      %p149 = pneg %p32
      %p150 = pneg %p56
      %p151 = pneg %p53
      %p152 = pneg %p77
      %p153 = pneg %p74
      %p154 = pneg %p103
      %p155 = pneg %p100
      %p156 = scmp.lt.s32.totalorder %s14, 1
      %s157 = scalar_select %p156, %s14, 1
      %s158 = smul.addr %s157, 5
      %s159 = smul.addr %s158, 8
      %s160 = scalar_lea.vmem %s3, %s159
      %p161 = scmp.lt.s32.totalorder %s14, 1
      %s162 = scalar_select %p161, %s14, 1
      %s163 = smul.addr %s162, 5
      %s164 = smul.addr %s163, 8
      %s165 = scalar_lea.vmem %s0, %s164
      %p166 = scmp.lt.s32.totalorder %s14, 1
      %s167 = scalar_select %p166, %s14, 1
      %s168 = smul.addr %s167, 5
      %s169 = smul.addr %s168, 8
      %s170 = scalar_lea.vmem %s3, %s169
      %v172 = vld [vmem:[%s165] sm:$0xff]
      %v173 = vld [vmem:[%s165 + $0x8] sm:$0xff]
      %v174 = vld [vmem:[%s165 + $0x10] sm:$0xff]
      %v175 = vld [vmem:[%s165 + $0x18] sm:$0xff]
      %v176 = vld [vmem:[%s165 + $0x20] sm:$0x1f]
      %v177 = vpack.c.bf16 %v173, %v172
      %v178 = vpack.c.bf16 %v175, %v174
      %v179 = vpack.c.bf16 %v176, %v176
      %v180 = vld [vmem:[%s1] sm:$0xf]
      %v181 = vld [vmem:[%s1 + $0x4] sm:$0xf]
      %v182 = vld [vmem:[%s1 + $0x8] sm:$0xf]
      %v183 = vld [vmem:[%s1 + $0xc] sm:$0xf]
      %v184 = vld [vmem:[%s1 + $0x10] sm:$0xf]
      %v185 = vld [vmem:[%s1 + $0x14] sm:$0xf]
      %v186 = vld [vmem:[%s1 + $0x18] sm:$0xf]
      %v187 = vld [vmem:[%s1 + $0x1c] sm:$0xf]
      %v188 = vld [vmem:[%s1 + $0x20] sm:$0xf]
      %v189 = vld [vmem:[%s1 + $0x24] sm:$0xf]
      %v190 = vld [vmem:[%s1 + $0x28] sm:$0xf]
      %v191 = vld [vmem:[%s1 + $0x2c] sm:$0xf]
      %v192 = vld [vmem:[%s1 + $0x30] sm:$0x3]
      %s193 = scalar_lea.vmem %s1, 52
      %v194 = vld [vmem:[%s193] sm:$0xf]
      %v195 = vld [vmem:[%s193 + $0x4] sm:$0xf]
      %v196 = vld [vmem:[%s193 + $0x8] sm:$0xf]
      %v197 = vld [vmem:[%s193 + $0xc] sm:$0xf]
      %v198 = vld [vmem:[%s193 + $0x10] sm:$0xf]
      %v199 = vld [vmem:[%s193 + $0x14] sm:$0xf]
      %v200 = vld [vmem:[%s193 + $0x18] sm:$0xf]
      %v201 = vld [vmem:[%s193 + $0x1c] sm:$0xf]
      %v202 = vld [vmem:[%s193 + $0x20] sm:$0xf]
      %v203 = vld [vmem:[%s193 + $0x24] sm:$0xf]
      %v204 = vld [vmem:[%s193 + $0x28] sm:$0xf]
      %v205 = vld [vmem:[%s193 + $0x2c] sm:$0xf]
      %v206 = vld [vmem:[%s193 + $0x30] sm:$0x3]
      %s207 = scalar_lea.vmem %s1, 104
      %v208 = vld [vmem:[%s207] sm:$0xf]
      %v209 = vld [vmem:[%s207 + $0x4] sm:$0xf]
      %v210 = vld [vmem:[%s207 + $0x8] sm:$0xf]
      %v211 = vld [vmem:[%s207 + $0xc] sm:$0xf]
      %v212 = vld [vmem:[%s207 + $0x10] sm:$0xf]
      %v213 = vld [vmem:[%s2] sm:$0xff]
      %v214 = vld [vmem:[%s2 + $0x8] sm:$0xff]
      %v215 = vld [vmem:[%s2 + $0x10] sm:$0xff]
      %v216 = vld [vmem:[%s2 + $0x18] sm:$0xff]
      %v217 = vld [vmem:[%s2 + $0x20] sm:$0xff]
      %v218 = vld [vmem:[%s2 + $0x28] sm:$0xff]
      %v219 = vld [vmem:[%s2 + $0x30] sm:$0xff]
      %v220 = vld [vmem:[%s2 + $0x38] sm:$0xff]
      %v221 = vld [vmem:[%s2 + $0x40] sm:$0xff]
      %v222 = vld [vmem:[%s2 + $0x48] sm:$0xff]
      %v223 = vld [vmem:[%s2 + $0x50] sm:$0xff]
      %v224 = vld [vmem:[%s2 + $0x58] sm:$0xff]
      %v225 = vld [vmem:[%s2 + $0x60] sm:$0xf]
      %s226 = scalar_lea.vmem %s2, 104
      %v227 = vld [vmem:[%s226] sm:$0xff]
      %v228 = vld [vmem:[%s226 + $0x8] sm:$0xff]
      %v229 = vld [vmem:[%s226 + $0x10] sm:$0xff]
      %v230 = vld [vmem:[%s226 + $0x18] sm:$0xff]
      %v231 = vld [vmem:[%s226 + $0x20] sm:$0xff]
      %v245 = vunpack.c.l.b16 %v194
      %v246 = vunpack.c.l.b16 %v195
      %v247 = vunpack.c.l.b16 %v196
      %v248 = vunpack.c.l.b16 %v197
      %v249 = vunpack.c.l.b16 %v198
      %v250 = vunpack.c.l.b16 %v199
      %v251 = vunpack.c.l.b16 %v200
      %v252 = vunpack.c.l.b16 %v201
      %v253 = vunpack.c.l.b16 %v202
      %v254 = vunpack.c.l.b16 %v203
      %v255 = vunpack.c.l.b16 %v204
      %v256 = vunpack.c.l.b16 %v205
      %v257 = vunpack.c.l.b16 %v206
      %v258 = vpack.c.b16 %v246, %v245
      %v259 = vpack.c.b16 %v248, %v247
      %v260 = vpack.c.b16 %v250, %v249
      %v261 = vpack.c.b16 %v252, %v251
      %v262 = vpack.c.b16 %v254, %v253
      %v263 = vpack.c.b16 %v256, %v255
      %v264 = vpack.c.b16 %v257, %v257
      %268 = vrot.lane.b32.xlu0 %v177, 127
      %v269 = vpop.permute.xlu0 %268
      %270 = vrot.lane.b32.xlu0 %v178, 127
      %v271 = vpop.permute.xlu0 %270
      %272 = vrot.lane.b32.xlu0 %v179, 127
      %v273 = vpop.permute.xlu0 %272
      %vm276 = vcmask 302080
      %v278 = vsel %vm276, %v258, 0
      %v281 = vsel %vm276, %v259, 0
      %v284 = vsel %vm276, %v260, 0
      %v287 = vsel %vm276, %v261, 0
      %v290 = vsel %vm276, %v262, 0
      %v293 = vsel %vm276, %v263, 0
      %v296 = vsel %vm276, %v264, 0
      %vm298 = vcmask 1041408
      %vm299 = vcmask 1042432
      %v300 = vsel %vm298, 4294967295, 65535
      %v301 = vsel %vm299, %v300, 0
      %v303 = vand.u32 %v273, %v301
      %305 = vmatprep.subr.bf16.mxu0 0
      %306 = vmatpush1.bf16.msra.mxu0 %v269
      %307 = vmatprep.subr.bf16.mxu0 0
      %308 = vmatpush1.bf16.msra.mxu0 %v271
      %309 = vmatprep.subr.bf16.mxu0 0
      %310 = vmatpush1.bf16.msra.mxu0 %v303
      %311 = vmatprep.subr.bf16.mxu0 0
      %312 = vmatpush1.bf16.msra.mxu0 0
      %313 = vmatprep.subr.bf16.mxu0 0
      %314 = vmatpush1.bf16.msra.mxu0 0
      %315 = vmatprep.subr.bf16.mxu0 0
      %316 = vmatpush1.bf16.msra.mxu0 0
      %317 = vmatprep.subr.bf16.mxu0 0
      %318 = vmatpush1.bf16.msra.mxu0 0
      %319 = vmatprep.subr.bf16.mxu0 0
      %320 = vmatpush1.bf16.msra.mxu0 0
      %321 = vmatprep.subr.bf16.mxu0 0
      %322 = vmatpush1.bf16.msra.mxu0 0
      %323 = vmatprep.subr.bf16.mxu0 0
      %324 = vmatpush1.bf16.msra.mxu0 0
      %325 = vmatprep.subr.bf16.mxu0 0
      %326 = vmatpush1.bf16.msra.mxu0 0
      %327 = vmatprep.subr.bf16.mxu0 0
      %328 = vmatpush1.bf16.msra.mxu0 0
      %329 = vmatprep.subr.bf16.mxu0 0
      %330 = vmatpush1.bf16.msra.mxu0 0
      %331 = vmatprep.subr.bf16.mxu0 0
      %332 = vmatpush1.bf16.msra.mxu0 0
      %333 = vmatprep.subr.bf16.mxu0 0
      %334 = vmatpush1.bf16.msra.mxu0 0
      %335 = vmatprep.subr.bf16.mxu0 0
      %336 = vmatpush1.bf16.msra.mxu0 0
      %337 = vmatprep.mubr.bf16.mxu0 0
      %338 = vmatmul.mubr.bf16.gmra.mrb[0].mxu0 %v278
      %v339 = vpop.f32.mrb[0].mxu0
      %v340 = vadd.f32 0.0, %v339
      %v341 = vpop.f32.mrb[0].mxu0
      %v342 = vpop.f32.mrb[0].mxu0
      %v343 = vadd.f32 0.0, %v342
      %v344 = vpop.f32.mrb[0].mxu0
      %345 = vmatprep.mubr.bf16.mxu0 0
      %346 = vmatmul.mubr.bf16.gmra.mrb[0].mxu0 %v281
      %v347 = vpop.f32.mrb[0].mxu0
      %v348 = vadd.f32 0.0, %v347
      %v349 = vpop.f32.mrb[0].mxu0
      %v350 = vpop.f32.mrb[0].mxu0
      %v351 = vadd.f32 0.0, %v350
      %v352 = vpop.f32.mrb[0].mxu0
      %353 = vmatprep.mubr.bf16.mxu0 0
      %354 = vmatmul.mubr.bf16.gmra.mrb[0].mxu0 %v284
      %v355 = vpop.f32.mrb[0].mxu0
      %v356 = vadd.f32 0.0, %v355
      %v357 = vpop.f32.mrb[0].mxu0
      %v358 = vpop.f32.mrb[0].mxu0
      %v359 = vadd.f32 0.0, %v358
      %v360 = vpop.f32.mrb[0].mxu0
      %361 = vmatprep.mubr.bf16.mxu0 0
      %362 = vmatmul.mubr.bf16.gmra.mrb[0].mxu0 %v287
      %v363 = vpop.f32.mrb[0].mxu0
      %v364 = vadd.f32 0.0, %v363
      %v365 = vpop.f32.mrb[0].mxu0
      %v366 = vpop.f32.mrb[0].mxu0
      %v367 = vadd.f32 0.0, %v366
      %v368 = vpop.f32.mrb[0].mxu0
      %369 = vmatprep.mubr.bf16.mxu0 0
      %370 = vmatmul.mubr.bf16.gmra.mrb[0].mxu0 %v290
      %v371 = vpop.f32.mrb[0].mxu0
      %v372 = vadd.f32 0.0, %v371
      %v373 = vpop.f32.mrb[0].mxu0
      %v374 = vpop.f32.mrb[0].mxu0
      %v375 = vadd.f32 0.0, %v374
      %v376 = vpop.f32.mrb[0].mxu0
      %377 = vmatprep.mubr.bf16.mxu0 0
      %378 = vmatmul.mubr.bf16.gmra.mrb[0].mxu0 %v293
      %v379 = vpop.f32.mrb[0].mxu0
      %v380 = vadd.f32 0.0, %v379
      %v381 = vpop.f32.mrb[0].mxu0
      %v382 = vpop.f32.mrb[0].mxu0
      %v383 = vadd.f32 0.0, %v382
      %v384 = vpop.f32.mrb[0].mxu0
      %385 = vmatprep.mubr.bf16.mxu0 0
      %386 = vmatmul.mubr.bf16.gmra.mrb[0].mxu0 %v296
      %v387 = vpop.f32.mrb[0].mxu0
      %v388 = vadd.f32 0.0, %v387
      %v389 = vpop.f32.mrb[0].mxu0
      %v390 = vpop.f32.mrb[0].mxu0
      %v391 = vpop.f32.mrb[0].mxu0
      %392 = vdwg.mxu0
      %v406 = vunpack.c.l.b16 %v180
      %v407 = vunpack.c.l.b16 %v181
      %v408 = vunpack.c.l.b16 %v182
      %v409 = vunpack.c.l.b16 %v183
      %v410 = vunpack.c.l.b16 %v184
      %v411 = vunpack.c.l.b16 %v185
      %v412 = vunpack.c.l.b16 %v186
      %v413 = vunpack.c.l.b16 %v187
      %v414 = vunpack.c.l.b16 %v188
      %v415 = vunpack.c.l.b16 %v189
      %v416 = vunpack.c.l.b16 %v190
      %v417 = vunpack.c.l.b16 %v191
      %v418 = vunpack.c.l.b16 %v192
      %v419 = vpack.c.b16 %v407, %v406
      %v420 = vpack.c.b16 %v409, %v408
      %v421 = vpack.c.b16 %v411, %v410
      %v422 = vpack.c.b16 %v413, %v412
      %v423 = vpack.c.b16 %v415, %v414
      %v424 = vpack.c.b16 %v417, %v416
      %v425 = vpack.c.b16 %v418, %v418
      %v427 = vsel %vm276, %v419, 0
      %v430 = vsel %vm276, %v420, 0
      %v433 = vsel %vm276, %v421, 0
      %v436 = vsel %vm276, %v422, 0
      %v439 = vsel %vm276, %v423, 0
      %v442 = vsel %vm276, %v424, 0
      %v445 = vsel %vm276, %v425, 0
      %v448 = vand.u32 %v179, %v301
      %450 = vmatprep.subr.bf16.mxu0 0
      %451 = vmatpush1.bf16.msra.mxu0 %v177
      %452 = vmatprep.subr.bf16.mxu0 0
      %453 = vmatpush1.bf16.msra.mxu0 %v178
      %454 = vmatprep.subr.bf16.mxu0 0
      %455 = vmatpush1.bf16.msra.mxu0 %v448
      %456 = vmatprep.subr.bf16.mxu0 0
      %457 = vmatpush1.bf16.msra.mxu0 0
      %458 = vmatprep.subr.bf16.mxu0 0
      %459 = vmatpush1.bf16.msra.mxu0 0
      %460 = vmatprep.subr.bf16.mxu0 0
      %461 = vmatpush1.bf16.msra.mxu0 0
      %462 = vmatprep.subr.bf16.mxu0 0
      %463 = vmatpush1.bf16.msra.mxu0 0
      %464 = vmatprep.subr.bf16.mxu0 0
      %465 = vmatpush1.bf16.msra.mxu0 0
      %466 = vmatprep.subr.bf16.mxu0 0
      %467 = vmatpush1.bf16.msra.mxu0 0
      %468 = vmatprep.subr.bf16.mxu0 0
      %469 = vmatpush1.bf16.msra.mxu0 0
      %470 = vmatprep.subr.bf16.mxu0 0
      %471 = vmatpush1.bf16.msra.mxu0 0
      %472 = vmatprep.subr.bf16.mxu0 0
      %473 = vmatpush1.bf16.msra.mxu0 0
      %474 = vmatprep.subr.bf16.mxu0 0
      %475 = vmatpush1.bf16.msra.mxu0 0
      %476 = vmatprep.subr.bf16.mxu0 0
      %477 = vmatpush1.bf16.msra.mxu0 0
      %478 = vmatprep.subr.bf16.mxu0 0
      %479 = vmatpush1.bf16.msra.mxu0 0
      %480 = vmatprep.subr.bf16.mxu0 0
      %481 = vmatpush1.bf16.msra.mxu0 0
      %482 = vmatprep.mubr.bf16.mxu0 0
      %483 = vmatmul.mubr.bf16.gmra.mrb[0].mxu0 %v427
      %v484 = vpop.f32.mrb[0].mxu0
      %v485 = vadd.f32 %v340, %v484
      %v486 = vpop.f32.mrb[0].mxu0
      %v487 = vpop.f32.mrb[0].mxu0
      %v488 = vadd.f32 %v343, %v487
      %v489 = vpop.f32.mrb[0].mxu0
      %490 = vmatprep.mubr.bf16.mxu0 0
      %491 = vmatmul.mubr.bf16.gmra.mrb[0].mxu0 %v430
      %v492 = vpop.f32.mrb[0].mxu0
      %v493 = vadd.f32 %v348, %v492
      %v494 = vpop.f32.mrb[0].mxu0
      %v495 = vpop.f32.mrb[0].mxu0
      %v496 = vadd.f32 %v351, %v495
      %v497 = vpop.f32.mrb[0].mxu0
      %498 = vmatprep.mubr.bf16.mxu0 0
      %499 = vmatmul.mubr.bf16.gmra.mrb[0].mxu0 %v433
      %v500 = vpop.f32.mrb[0].mxu0
      %v501 = vadd.f32 %v356, %v500
      %v502 = vpop.f32.mrb[0].mxu0
      %v503 = vpop.f32.mrb[0].mxu0
      %v504 = vadd.f32 %v359, %v503
      %v505 = vpop.f32.mrb[0].mxu0
      %506 = vmatprep.mubr.bf16.mxu0 0
      %507 = vmatmul.mubr.bf16.gmra.mrb[0].mxu0 %v436
      %v508 = vpop.f32.mrb[0].mxu0
      %v509 = vadd.f32 %v364, %v508
      %v510 = vpop.f32.mrb[0].mxu0
      %v511 = vpop.f32.mrb[0].mxu0
      %v512 = vadd.f32 %v367, %v511
      %v513 = vpop.f32.mrb[0].mxu0
      %514 = vmatprep.mubr.bf16.mxu0 0
      %515 = vmatmul.mubr.bf16.gmra.mrb[0].mxu0 %v439
      %v516 = vpop.f32.mrb[0].mxu0
      %v517 = vadd.f32 %v372, %v516
      %v518 = vpop.f32.mrb[0].mxu0
      %v519 = vpop.f32.mrb[0].mxu0
      %v520 = vadd.f32 %v375, %v519
      %v521 = vpop.f32.mrb[0].mxu0
      %522 = vmatprep.mubr.bf16.mxu0 0
      %523 = vmatmul.mubr.bf16.gmra.mrb[0].mxu0 %v442
      %v524 = vpop.f32.mrb[0].mxu0
      %v525 = vadd.f32 %v380, %v524
      %v526 = vpop.f32.mrb[0].mxu0
      %v527 = vpop.f32.mrb[0].mxu0
      %v528 = vadd.f32 %v383, %v527
      %v529 = vpop.f32.mrb[0].mxu0
      %530 = vmatprep.mubr.bf16.mxu0 0
      %531 = vmatmul.mubr.bf16.gmra.mrb[0].mxu0 %v445
      %v532 = vpop.f32.mrb[0].mxu0
      %v533 = vadd.f32 %v388, %v532
      %v534 = vpop.f32.mrb[0].mxu0
      %v535 = vpop.f32.mrb[0].mxu0
      %v536 = vpop.f32.mrb[0].mxu0
      %537 = vdwg.mxu0
      %539 = vset.pattern.permute.xlu0 0
      %540 = vperm.xlu0 %539, %v213
      %v541 = vpop.permute.xlu0 %540
      %544 = vset.pattern.permute.xlu0 0
      %545 = vperm.xlu0 %544, %v214
      %v546 = vpop.permute.xlu0 %545
      %549 = vset.pattern.permute.xlu0 0
      %550 = vperm.xlu0 %549, %v215
      %v551 = vpop.permute.xlu0 %550
      %554 = vset.pattern.permute.xlu0 0
      %555 = vperm.xlu0 %554, %v216
      %v556 = vpop.permute.xlu0 %555
      %559 = vset.pattern.permute.xlu0 0
      %560 = vperm.xlu0 %559, %v217
      %v561 = vpop.permute.xlu0 %560
      %564 = vset.pattern.permute.xlu0 0
      %565 = vperm.xlu0 %564, %v218
      %v566 = vpop.permute.xlu0 %565
      %569 = vset.pattern.permute.xlu0 0
      %570 = vperm.xlu0 %569, %v219
      %v571 = vpop.permute.xlu0 %570
      %574 = vset.pattern.permute.xlu0 0
      %575 = vperm.xlu0 %574, %v220
      %v576 = vpop.permute.xlu0 %575
      %579 = vset.pattern.permute.xlu0 0
      %580 = vperm.xlu0 %579, %v221
      %v581 = vpop.permute.xlu0 %580
      %584 = vset.pattern.permute.xlu0 0
      %585 = vperm.xlu0 %584, %v222
      %v586 = vpop.permute.xlu0 %585
      %589 = vset.pattern.permute.xlu0 0
      %590 = vperm.xlu0 %589, %v223
      %v591 = vpop.permute.xlu0 %590
      %594 = vset.pattern.permute.xlu0 0
      %595 = vperm.xlu0 %594, %v224
      %v596 = vpop.permute.xlu0 %595
      %599 = vset.pattern.permute.xlu0 0
      %600 = vperm.xlu0 %599, %v225
      %v601 = vpop.permute.xlu0 %600
      %v603 = vadd.f32 %v485, %v541
      %v604 = vadd.f32 %v488, %v546
      %v605 = vadd.f32 %v493, %v551
      %v606 = vadd.f32 %v496, %v556
      %v607 = vadd.f32 %v501, %v561
      %v608 = vadd.f32 %v504, %v566
      %v609 = vadd.f32 %v509, %v571
      %v610 = vadd.f32 %v512, %v576
      %v611 = vadd.f32 %v517, %v581
      %v612 = vadd.f32 %v520, %v586
      %v613 = vadd.f32 %v525, %v591
      %v614 = vadd.f32 %v528, %v596
      %v615 = vadd.f32 %v533, %v601
      %v616 = vmax.f32 %v603, 0.0
      %v617 = vmax.f32 %v604, 0.0
      %v618 = vmax.f32 %v605, 0.0
      %v619 = vmax.f32 %v606, 0.0
      %v620 = vmax.f32 %v607, 0.0
      %v621 = vmax.f32 %v608, 0.0
      %v622 = vmax.f32 %v609, 0.0
      %v623 = vmax.f32 %v610, 0.0
      %v624 = vmax.f32 %v611, 0.0
      %v625 = vmax.f32 %v612, 0.0
      %v626 = vmax.f32 %v613, 0.0
      %v627 = vmax.f32 %v614, 0.0
      %v628 = vmax.f32 %v615, 0.0
      %v629 = vpack.c.bf16 %v617, %v616
      %v630 = vpack.c.bf16 %v619, %v618
      %v631 = vpack.c.bf16 %v621, %v620
      %v632 = vpack.c.bf16 %v623, %v622
      %v633 = vpack.c.bf16 %v625, %v624
      %v634 = vpack.c.bf16 %v627, %v626
      %v635 = vpack.c.bf16 %v628, %v628
      %637 = vset.pattern.permute.xlu0 0
      %638 = vperm.xlu0 %637, %v227
      %v639 = vpop.permute.xlu0 %638
      %642 = vset.pattern.permute.xlu0 0
      %643 = vperm.xlu0 %642, %v228
      %v644 = vpop.permute.xlu0 %643
      %647 = vset.pattern.permute.xlu0 0
      %648 = vperm.xlu0 %647, %v229
      %v649 = vpop.permute.xlu0 %648
      %652 = vset.pattern.permute.xlu0 0
      %653 = vperm.xlu0 %652, %v230
      %v654 = vpop.permute.xlu0 %653
      %657 = vset.pattern.permute.xlu0 0
      %658 = vperm.xlu0 %657, %v231
      %v659 = vpop.permute.xlu0 %658
      %v666 = vunpack.c.l.b16 %v208
      %v667 = vunpack.c.l.b16 %v209
      %v668 = vunpack.c.l.b16 %v210
      %v669 = vunpack.c.l.b16 %v211
      %v670 = vunpack.c.l.b16 %v212
      %v671 = vpack.c.b16 %v667, %v666
      %v672 = vpack.c.b16 %v669, %v668
      %v673 = vpack.c.b16 %v670, %v670
      %vm674 = vcmask 818176
      %v676 = vsel %vm674, %v671, 0
      %v679 = vsel %vm674, %v672, 0
      %v682 = vsel %vm674, %v673, 0
      %v685 = vsel %vm298, %v635, 0
      %687 = vmatprep.subr.bf16.mxu0 0
      %688 = vmatpush1.bf16.msra.mxu0 %v629
      %689 = vmatprep.subr.bf16.mxu0 0
      %690 = vmatpush1.bf16.msra.mxu0 %v630
      %691 = vmatprep.subr.bf16.mxu0 0
      %692 = vmatpush1.bf16.msra.mxu0 %v631
      %693 = vmatprep.subr.bf16.mxu0 0
      %694 = vmatpush1.bf16.msra.mxu0 %v632
      %695 = vmatprep.subr.bf16.mxu0 0
      %696 = vmatpush1.bf16.msra.mxu0 %v633
      %697 = vmatprep.subr.bf16.mxu0 0
      %698 = vmatpush1.bf16.msra.mxu0 %v634
      %699 = vmatprep.subr.bf16.mxu0 0
      %700 = vmatpush1.bf16.msra.mxu0 %v685
      %701 = vmatprep.subr.bf16.mxu0 0
      %702 = vmatpush1.bf16.msra.mxu0 0
      %703 = vmatprep.subr.bf16.mxu0 0
      %704 = vmatpush1.bf16.msra.mxu0 0
      %705 = vmatprep.subr.bf16.mxu0 0
      %706 = vmatpush1.bf16.msra.mxu0 0
      %707 = vmatprep.subr.bf16.mxu0 0
      %708 = vmatpush1.bf16.msra.mxu0 0
      %709 = vmatprep.subr.bf16.mxu0 0
      %710 = vmatpush1.bf16.msra.mxu0 0
      %711 = vmatprep.subr.bf16.mxu0 0
      %712 = vmatpush1.bf16.msra.mxu0 0
      %713 = vmatprep.subr.bf16.mxu0 0
      %714 = vmatpush1.bf16.msra.mxu0 0
      %715 = vmatprep.subr.bf16.mxu0 0
      %716 = vmatpush1.bf16.msra.mxu0 0
      %717 = vmatprep.subr.bf16.mxu0 0
      %718 = vmatpush1.bf16.msra.mxu0 0
      %719 = vmatprep.mubr.bf16.mxu0 0
      %720 = vmatmul.mubr.bf16.gmra.mrb[0].mxu0 %v676
      %v721 = vpop.f32.mrb[0].mxu0
      %v722 = vadd.f32 %v639, %v721
      %v723 = vpop.f32.mrb[0].mxu0
      %v724 = vpop.f32.mrb[0].mxu0
      %v725 = vadd.f32 %v644, %v724
      %v726 = vpop.f32.mrb[0].mxu0
      %727 = vmatprep.mubr.bf16.mxu0 0
      %728 = vmatmul.mubr.bf16.gmra.mrb[0].mxu0 %v679
      %v729 = vpop.f32.mrb[0].mxu0
      %v730 = vadd.f32 %v649, %v729
      %v731 = vpop.f32.mrb[0].mxu0
      %v732 = vpop.f32.mrb[0].mxu0
      %v733 = vadd.f32 %v654, %v732
      %v734 = vpop.f32.mrb[0].mxu0
      %735 = vmatprep.mubr.bf16.mxu0 0
      %736 = vmatmul.mubr.bf16.gmra.mrb[0].mxu0 %v682
      %v737 = vpop.f32.mrb[0].mxu0
      %v738 = vadd.f32 %v659, %v737
      %v739 = vpop.f32.mrb[0].mxu0
      %v740 = vpop.f32.mrb[0].mxu0
      %v741 = vpop.f32.mrb[0].mxu0
      %742 = vdwg.mxu0
      %vm743 = vcmask 121856
      %744 = vst.msk [vmem:[%s170] sm:$0xff] %vm743, %v722
      %745 = vst.msk [vmem:[%s170 + $0x8] sm:$0xff] %vm743, %v725
      %746 = vst.msk [vmem:[%s170 + $0x10] sm:$0xff] %vm743, %v730
      %747 = vst.msk [vmem:[%s170 + $0x18] sm:$0xff] %vm743, %v733
      %vm748 = vcmask 118784
      %749 = vst.msk [vmem:[%s170 + $0x20] sm:$0x1f] %vm748, %v738
      %p750 = scmp.lt.s32.totalorder %s14, 1
      %s751 = scalar_select %p750, %s14, 1
      %s752 = smul.addr %s751, 5
      %s753 = smul.addr %s752, 8
      %s754 = scalar_lea.vmem %s3, %s753
      // Predicated region
      $region33: #{bfnet_forward.1} parent=31 // pred_check
        %p755 = pneg %p100
      $region34: #{bfnet_forward.1} parent=31 // pred_check_branch
        %757 = sbr.rel (%p755) target = $region36
      $region35: #{bfnet_forward.1} parent=31 // pred_region
        _
      $region36: #{bfnet_forward.1} parent=31 // pred_fallthru
        _
    $region32: #{bfnet_forward.1} parent=5 // pred_fallthru
      _
    %p758 = scmp.le.s32.totalorder 2, %s9
    // Predicated region
    $region37: #{bfnet_forward.1} parent=5 // pred_check
      %p759 = pneg %p758
    $region38: #{bfnet_forward.1} parent=5 // pred_check_branch
      %761 = sbr.rel (%p759) target = $region40
    $region39: #{bfnet_forward.1} parent=5 // pred_region
      %s762 = ssub.s32 %s9, 2
      // Predicated region
      $region41: #{bfnet_forward.1} parent=39 // pred_check
        %p763 = pneg %p106
      $region42: #{bfnet_forward.1} parent=39 // pred_check_branch
        %765 = sbr.rel (%p763) target = $region44
      $region43: #{bfnet_forward.1} parent=39 // pred_region
        %p766 = scmp.lt.s32.totalorder %s15, 1
        %s767 = scalar_select %p766, %s15, 1
        %s768 = smul.addr %s767, 5
        %s769 = smul.addr %s768, 8
        %s770 = scalar_lea.vmem %s3, %s769
      $region44: #{bfnet_forward.1} parent=39 // pred_fallthru
        _
    $region40: #{bfnet_forward.1} parent=5 // pred_fallthru
      _
  $region6: #{bfnet_forward.1} parent=0 // loop_footer
    %s13 = sadd.s32 1, %s9
  $region7: #{bfnet_forward.1} parent=0 // loop_footer_branch
    %8 = sbr.rel target = $region3
  $region8: #{bfnet_forward.1} parent=0 // loop_exit
    _

</llo_original>
